<compile_context>
chip_gen: v5e
topology: v5e:2x2
jax: 0.10.0
libtpu: 0.0.40
codegen_flags: <defaults>
</compile_context>

<pallas_src>
import math
from functools import partial

import numpy as np
import jax
import jax.numpy as jnp
from jax.experimental import pallas as pl
from jax.experimental.pallas import tpu as pltpu

# ----------------------------------------------------------------------------
# Small (but structurally faithful) configuration
# ----------------------------------------------------------------------------
IMG_SIZE = (32, 32)        # (540, 960) in the original
PATCH = 8                  # 60 in the original
IN_CHANS = 2
EMBED = 64                 # 1024 in the original
DEPTH = 2                  # 8
NUM_HEADS = 4              # 16
OUT_PATCH = 4              # 30  (== PATCH // 2, required by unpatchify)
OUT_CHANS = 1
DEC_EMBED = 64             # 1024
DEC_DEPTH = 2              # 4
DEC_HEADS = 4              # 16
MLP_RATIO = 4.0
LN_EPS = 1e-5              # nn.LayerNorm default

GRID_H = IMG_SIZE[0] // PATCH
GRID_W = IMG_SIZE[1] // PATCH
NUM_PATCHES = GRID_H * GRID_W
SEQ_LEN = NUM_PATCHES + 1          # + cls token
SEQ_PAD = ((SEQ_LEN + 7) // 8) * 8  # pad L to a multiple of 8 (17 -> 24)
PRED_PAD = 128                      # lane-dense pred-head output width


# ----------------------------------------------------------------------------
# Pallas kernels
# ----------------------------------------------------------------------------
def _linear_acc_kernel(x_ref, w_ref, b_ref, o_ref, acc_ref):
    """Tiled (M, K) @ (K, N) + b with f32 accumulation over the K grid axis."""
    @pl.when(pl.program_id(1) == 0)
    def _():
        acc_ref[...] = jnp.zeros_like(acc_ref)

    acc_ref[...] += jnp.dot(x_ref[...].astype(jnp.bfloat16), w_ref[...],
                            preferred_element_type=jnp.float32)

    @pl.when(pl.program_id(1) == pl.num_programs(1) - 1)
    def _():
        o_ref[...] = (acc_ref[...] + b_ref[...]).astype(o_ref.dtype)


def pallas_linear(x2d, w, b):
    M, K = x2d.shape
    N = w.shape[1]
    tm = 256 if (M % 256 == 0 and M > 256) else M
    tk = 2048 if (K % 2048 == 0 and K > 2048) else K
    return pl.pallas_call(
        _linear_acc_kernel,
        out_shape=jax.ShapeDtypeStruct((M, N), jnp.float32),
        grid=(M // tm, K // tk),
        in_specs=[pl.BlockSpec((tm, tk), lambda i, k: (i, k)),
                  pl.BlockSpec((tk, N), lambda i, k: (k, 0)),
                  pl.BlockSpec((1, N), lambda i, k: (0, 0))],
        out_specs=pl.BlockSpec((tm, N), lambda i, k: (i, 0)),
        scratch_shapes=[pltpu.VMEM((tm, N), jnp.float32)],
        compiler_params=pltpu.CompilerParams(
            dimension_semantics=("parallel", "arbitrary")),
    )(x2d, w, b)


def _norm_linear_kernel(x_ref, nw_ref, nb_ref, w_ref, b_ref, o_ref):
    x = x_ref[...].astype(jnp.float32)
    mu = jnp.mean(x, axis=-1, keepdims=True)
    var = jnp.mean(jnp.square(x - mu), axis=-1, keepdims=True)
    xn = (x - mu) * jax.lax.rsqrt(var + LN_EPS) * nw_ref[...] + nb_ref[...]
    o_ref[...] = (jnp.dot(xn.astype(jnp.bfloat16), w_ref[...],
                          preferred_element_type=jnp.float32)
                  + b_ref[...]).astype(o_ref.dtype)


def pallas_norm_linear(x2d, nw, nb, w, b):
    """Fused LayerNorm -> Linear on a (M, K) slab, tiled & pipelined over M."""
    M, K = x2d.shape
    N = w.shape[1]
    tm = 256 if (M % 256 == 0 and M > 256) else M
    return pl.pallas_call(
        _norm_linear_kernel,
        out_shape=jax.ShapeDtypeStruct((M, N), jnp.float32),
        grid=(M // tm,),
        in_specs=[pl.BlockSpec((tm, K), lambda i: (i, 0)),
                  pl.BlockSpec((1, K), lambda i: (0, 0)),
                  pl.BlockSpec((1, K), lambda i: (0, 0)),
                  pl.BlockSpec((K, N), lambda i: (0, 0)),
                  pl.BlockSpec((1, N), lambda i: (0, 0))],
        out_specs=pl.BlockSpec((tm, N), lambda i: (i, 0)),
        compiler_params=pltpu.CompilerParams(
            dimension_semantics=("parallel",)),
    )(x2d, nw, nb, w, b)


def _norm_linear_posadd_kernel(x_ref, nw_ref, nb_ref, w_ref, b_ref, pos_ref,
                               o_ref):
    """LayerNorm -> Linear -> + positional table (broadcast over batch)."""
    Bb, Lp, K = x_ref.shape
    N = o_ref.shape[-1]
    x = x_ref[...].astype(jnp.float32).reshape(Bb * Lp, K)
    mu = jnp.mean(x, axis=-1, keepdims=True)
    var = jnp.mean(jnp.square(x - mu), axis=-1, keepdims=True)
    xn = (x - mu) * jax.lax.rsqrt(var + LN_EPS) * nw_ref[...] + nb_ref[...]
    y = (jnp.dot(xn.astype(jnp.bfloat16), w_ref[...],
                 preferred_element_type=jnp.float32) + b_ref[...])
    o_ref[...] = (y.reshape(Bb, Lp, N) + pos_ref[...][None]).astype(o_ref.dtype)


def pallas_dec_embed(x3d, nw, nb, w, b, pos):
    """enc-LayerNorm -> decoder_embed -> + decoder pos embed, tiled over batch.

    The (Lp, Ddec) pos table is streamed ONCE (not tiled across the batch)."""
    B, Lp, K = x3d.shape
    N = w.shape[1]
    Bb = 1 if B > 1 else B
    return pl.pallas_call(
        _norm_linear_posadd_kernel,
        out_shape=jax.ShapeDtypeStruct((B, Lp, N), jnp.float32),
        grid=(B // Bb,),
        in_specs=[pl.BlockSpec((Bb, Lp, K), lambda i: (i, 0, 0)),
                  pl.BlockSpec((1, K), lambda i: (0, 0)),
                  pl.BlockSpec((1, K), lambda i: (0, 0)),
                  pl.BlockSpec((K, N), lambda i: (0, 0)),
                  pl.BlockSpec((1, N), lambda i: (0, 0)),
                  pl.BlockSpec((Lp, N), lambda i: (0, 0))],
        out_specs=pl.BlockSpec((Bb, Lp, N), lambda i: (i, 0, 0)),
        compiler_params=pltpu.CompilerParams(
            dimension_semantics=("parallel",)),
    )(x3d, nw, nb, w, b, pos)


def _stack_kernel(x_ref, ln1w, ln1b, qkvw, qkvb, projw, projb,
                  ln2w, ln2b, fc1w, fc1b, fc2w, fc2b, o_ref,
                  *, num_heads, seq_len):
    """Full pre-norm ViT block stack.

    grid = (batch_chunk, layer).  The (Bc, Lp, D) activation block stays
    resident in VMEM across the layer axis (same output block index each
    layer); per-layer weights (stacked on a leading layer dim, bf16) are
    streamed from HBM once per layer.
    """
    layer = pl.program_id(1)

    @pl.when(layer == 0)
    def _():
        # Seed the VMEM-resident residual from the input block.
        # TODO(synk): alias input/output HBM buffers to also save the HBM copy.
        o_ref[...] = x_ref[...]

    Bc, Lp, D = o_ref.shape
    hd = D // num_heads
    M = Bc * Lp
    scale = 1.0 / math.sqrt(hd)

    x = o_ref[...].astype(jnp.float32).reshape(M, D)   # fold batch into M

    # ---------------- attention branch: x + proj(MHA(LN1(x))) ----------------
    mu = jnp.mean(x, axis=-1, keepdims=True)
    var = jnp.mean(jnp.square(x - mu), axis=-1, keepdims=True)
    xn = (x - mu) * jax.lax.rsqrt(var + LN_EPS) * ln1w[0] + ln1b[0]

    qkv = jnp.dot(xn.astype(jnp.bfloat16), qkvw[0],
                  preferred_element_type=jnp.float32) + qkvb[0]       # (M, 3D)

    q3 = (qkv[:, 0:D] * scale).astype(jnp.bfloat16).reshape(Bc, Lp, D)
    k3 = qkv[:, D:2 * D].astype(jnp.bfloat16).reshape(Bc, Lp, D)
    v3 = qkv[:, 2 * D:3 * D].astype(jnp.bfloat16).reshape(Bc, Lp, D)

    # Key-padding mask (positions >= seq_len are zero-pad tokens).  Padded
    # QUERY rows still compute garbage-but-finite values; they never feed real
    # rows and are sliced off after the stack — do not pool over them.
    key_pos = jax.lax.broadcasted_iota(jnp.int32, (Lp, Lp), 1)
    key_mask = (key_pos < seq_len)[None]                              # (1,Lp,Lp)

    # Short loop over heads only (NOT batch*heads): each step is a single
    # batched 3-D einsum on the MXU; merge is one lane-concat.
    head_outs = []
    for h in range(num_heads):
        sl = slice(h * hd, (h + 1) * hd)
        s = jnp.einsum('bqd,bkd->bqk', q3[:, :, sl], k3[:, :, sl],
                       preferred_element_type=jnp.float32)            # (Bc,Lp,Lp)
        s = jnp.where(key_mask, s, -1e30)
        s = s - jnp.max(s, axis=-1, keepdims=True)
        p = jnp.exp(s)
        # approx reciprocal runs on the EUP slot; ~1e-3 rel. deviation vs exact
        p = p * pl.reciprocal(jnp.sum(p, axis=-1, keepdims=True), approx=True)
        ho = jnp.einsum('bqk,bkd->bqd', p.astype(jnp.bfloat16), v3[:, :, sl],
                        preferred_element_type=jnp.float32)           # (Bc,Lp,hd)
        head_outs.append(ho.astype(jnp.bfloat16))

    attn = jnp.concatenate(head_outs, axis=-1).reshape(M, D)          # (M, D) bf16

    attn = jnp.dot(attn, projw[0],
                   preferred_element_type=jnp.float32) + projb[0]
    x = x + attn

    # ---------------- MLP branch: x + fc2(gelu(fc1(LN2(x)))) -----------------
    mu2 = jnp.mean(x, axis=-1, keepdims=True)
    var2 = jnp.mean(jnp.square(x - mu2), axis=-1, keepdims=True)
    xn2 = (x - mu2) * jax.lax.rsqrt(var2 + LN_EPS) * ln2w[0] + ln2b[0]

    h1 = jnp.dot(xn2.astype(jnp.bfloat16), fc1w[0],
                 preferred_element_type=jnp.float32) + fc1b[0]
    h1 = jax.nn.gelu(h1, approximate=False)        # erf-GELU == nn.GELU default
    h2 = jnp.dot(h1.astype(jnp.bfloat16), fc2w[0],
                 preferred_element_type=jnp.float32) + fc2b[0]
    x = x + h2

    o_ref[...] = x.reshape(Bc, Lp, D).astype(o_ref.dtype)


def pallas_block_stack(x, stacked, num_heads, seq_len):
    """Run all transformer layers in one pallas_call.

    x: (B, Lp, D); stacked: tuple of per-layer params with leading layer dim.
    """
    B, Lp, D = x.shape
    depth = stacked[0].shape[0]
    # Only split the batch when each chunk keeps a reasonable MXU M-fill;
    # otherwise the per-layer weight stack would be re-streamed per chunk
    # (dominant HBM cost on 1-TC chips) for no fill benefit.
    num_chunks = 2 if (B % 2 == 0 and (B // 2) * Lp >= 256) else 1
    Bc = B // num_chunks

    x_spec = pl.BlockSpec((Bc, Lp, D), lambda c, l: (c, 0, 0))
    w_specs = [pl.BlockSpec((1,) + p.shape[1:], lambda c, l: (l, 0, 0))
               for p in stacked]

    return pl.pallas_call(
        partial(_stack_kernel, num_heads=num_heads, seq_len=seq_len),
        out_shape=jax.ShapeDtypeStruct((B, Lp, D), jnp.float32),
        grid=(num_chunks, depth),
        in_specs=[x_spec] + w_specs,
        out_specs=pl.BlockSpec((Bc, Lp, D), lambda c, l: (c, 0, 0)),
        compiler_params=pltpu.CompilerParams(
            dimension_semantics=("parallel", "arbitrary")),
    )(x, *stacked)


# ----------------------------------------------------------------------------
# Deterministic parameter init (synthetic; mirrors the module's init scheme)
# ----------------------------------------------------------------------------
def _xavier(key, fan_in, fan_out):
    lim = math.sqrt(6.0 / (fan_in + fan_out))
    return jax.random.uniform(key, (fan_in, fan_out), jnp.float32, -lim, lim)


def _get_1d_sincos(embed_dim, pos):
    omega = np.arange(embed_dim // 2, dtype=np.float64)
    omega /= embed_dim / 2.0
    omega = 1.0 / 10000 ** omega
    out = np.einsum('m,d->md', pos.reshape(-1), omega)
    return np.concatenate([np.sin(out), np.cos(out)], axis=1)


def _get_2d_sincos_pos_embed(embed_dim, grid_size, cls_token=False):
    grid_h = np.arange(grid_size, dtype=np.float32)
    grid_w = np.arange(grid_size, dtype=np.float32)
    grid = np.meshgrid(grid_w, grid_h)
    grid = np.stack(grid, axis=0).reshape([2, 1, grid_size, grid_size])
    emb_h = _get_1d_sincos(embed_dim // 2, grid[0])
    emb_w = _get_1d_sincos(embed_dim // 2, grid[1])
    emb = np.concatenate([emb_h, emb_w], axis=1)
    if cls_token:
        emb = np.concatenate([np.zeros([1, embed_dim]), emb], axis=0)
    return emb.astype(np.float32)


_LAYER_KEYS = ('ln1w', 'ln1b', 'qkvw', 'qkvb', 'projw', 'projb',
               'ln2w', 'ln2b', 'fc1w', 'fc1b', 'fc2w', 'fc2b')


def _init_block_params(key, dim, mlp_hidden):
    ks = jax.random.split(key, 4)
    f32 = jnp.float32
    return {
        'ln1w': jnp.ones((1, dim), f32), 'ln1b': jnp.zeros((1, dim), f32),
        'qkvw': _xavier(ks[0], dim, 3 * dim).astype(jnp.bfloat16),
        'qkvb': jnp.zeros((1, 3 * dim), f32),
        'projw': _xavier(ks[1], dim, dim).astype(jnp.bfloat16),
        'projb': jnp.zeros((1, dim), f32),
        'ln2w': jnp.ones((1, dim), f32), 'ln2b': jnp.zeros((1, dim), f32),
        'fc1w': _xavier(ks[2], dim, mlp_hidden).astype(jnp.bfloat16),
        'fc1b': jnp.zeros((1, mlp_hidden), f32),
        'fc2w': _xavier(ks[3], mlp_hidden, dim).astype(jnp.bfloat16),
        'fc2b': jnp.zeros((1, dim), f32),
    }


def _stack_layers(layers):
    # Stack per-layer params on a leading layer dim (weights: (L, in, out),
    # biases / LN params: (L, 1, feat)) for layer-indexed BlockSpecs.
    return tuple(jnp.stack([lay[k] for lay in layers], axis=0)
                 for k in _LAYER_KEYS)


def init_params(key):
    mlp_hidden = int(EMBED * MLP_RATIO)
    dec_mlp_hidden = int(DEC_EMBED * MLP_RATIO)
    keys = jax.random.split(key, 8 + DEPTH + DEC_DEPTH)

    patch_dim = IN_CHANS * PATCH * PATCH
    n_g = OUT_PATCH ** 2 * OUT_CHANS
    n_rb = n_g // 2

    enc_layers = [_init_block_params(keys[2 + i], EMBED, mlp_hidden)
                  for i in range(DEPTH)]
    dec_layers = [_init_block_params(keys[3 + DEPTH + i], DEC_EMBED, dec_mlp_hidden)
                  for i in range(DEC_DEPTH)]

    pos = _get_2d_sincos_pos_embed(EMBED, int(NUM_PATCHES ** 0.5), cls_token=True)
    dpos = _get_2d_sincos_pos_embed(DEC_EMBED, int(NUM_PATCHES ** 0.5), cls_token=True)
    dec_pos_pad = np.zeros((SEQ_PAD, DEC_EMBED), np.float32)
    dec_pos_pad[:SEQ_LEN] = dpos

    def pad_pred(w):
        out = jnp.zeros((DEC_EMBED, PRED_PAD), jnp.float32)
        return out.at[:, :w.shape[1]].set(w).astype(jnp.bfloat16)

    params = {
        'patch_w': _xavier(keys[0], patch_dim, EMBED).astype(jnp.bfloat16),
        'patch_b': jnp.zeros((1, EMBED), jnp.float32),
        'cls_token': 0.02 * jax.random.normal(keys[1], (1, 1, EMBED), jnp.float32),
        'pos_embed': jnp.asarray(pos)[None],           # (1, L, EMBED)
        'enc_stack': _stack_layers(enc_layers),
        'enc_norm_w': jnp.ones((1, EMBED), jnp.float32),
        'enc_norm_b': jnp.zeros((1, EMBED), jnp.float32),
        'dec_embed_w': _xavier(keys[2 + DEPTH], EMBED, DEC_EMBED).astype(jnp.bfloat16),
        'dec_embed_b': jnp.zeros((1, DEC_EMBED), jnp.float32),
        'dec_pos_pad': jnp.asarray(dec_pos_pad),        # (SEQ_PAD, DEC_EMBED)
        'dec_stack': _stack_layers(dec_layers),
        'dec_norm_w': jnp.ones((1, DEC_EMBED), jnp.float32),
        'dec_norm_b': jnp.zeros((1, DEC_EMBED), jnp.float32),
        'pred_g_w': pad_pred(_xavier(keys[3 + DEPTH + DEC_DEPTH], DEC_EMBED, n_g)),
        'pred_g_b': jnp.zeros((1, PRED_PAD), jnp.float32),
        'pred_rb_w': pad_pred(_xavier(keys[4 + DEPTH + DEC_DEPTH], DEC_EMBED, n_rb)),
        'pred_rb_b': jnp.zeros((1, PRED_PAD), jnp.float32),
    }
    return params


# ----------------------------------------------------------------------------
# Forward pass
# ----------------------------------------------------------------------------
def spr_forward(params, x, color='green'):
    # layout: x is NCHW (B, C, H, W)
    B, C, H, W = x.shape
    gh, gw = H // PATCH, W // PATCH
    L = gh * gw + 1
    Lp = SEQ_PAD

    # ---- encoder prologue: patchify (plain-JAX layout) + patch-embed linear ----
    patches = x.reshape(B, C, gh, PATCH, gw, PATCH)
    patches = patches.transpose(0, 2, 4, 1, 3, 5).reshape(B * gh * gw,
                                                          C * PATCH * PATCH)
    patches = patches.astype(jnp.bfloat16)     # halve HBM->VMEM bytes of the slab
    tok = pallas_linear(patches, params['patch_w'], params['patch_b'])
    tok = tok.reshape(B, gh * gw, EMBED)

    cls = jnp.broadcast_to(params['cls_token'], (B, 1, EMBED))
    xs = jnp.concatenate([cls, tok], axis=1) + params['pos_embed']   # (B, L, E)
    xs = jnp.pad(xs, ((0, 0), (0, Lp - L), (0, 0)))                  # (B, Lp, E)

    # ---- fused encoder block stack (activation VMEM-resident across layers) ----
    xs = pallas_block_stack(xs, params['enc_stack'], NUM_HEADS, L)

    # ---- fused: enc LayerNorm -> decoder_embed -> + decoder pos embed ----
    d = pallas_dec_embed(xs,
                         params['enc_norm_w'], params['enc_norm_b'],
                         params['dec_embed_w'], params['dec_embed_b'],
                         params['dec_pos_pad'])                      # (B, Lp, Ddec)

    # ---- fused decoder block stack ----
    d = pallas_block_stack(d, params['dec_stack'], DEC_HEADS, L)

    # ---- fused: dec LayerNorm -> pred head (lane-padded to PRED_PAD cols) ----
    if color == 'green':
        w, b = params['pred_g_w'], params['pred_g_b']
        n_out = OUT_PATCH ** 2 * OUT_CHANS
    else:
        w, b = params['pred_rb_w'], params['pred_rb_b']
        n_out = OUT_PATCH ** 2 * OUT_CHANS // 2
    pred = pallas_norm_linear(d.reshape(B * Lp, DEC_EMBED),
                              params['dec_norm_w'], params['dec_norm_b'], w, b)
    pred = pred.reshape(B, Lp, PRED_PAD)[:, 1:L, :n_out]   # drop cls + padding

    # ---- unpatchify (plain-JAX layout) ----
    p = OUT_PATCH
    oh, ow = H // 2 // p, W // 2 // p
    if color == 'green':
        xx = pred.reshape(B, oh, ow, p, p, 1)
        xx = jnp.einsum('nhwpqc->nchpwq', xx)
        imgs = xx.reshape(B, 1, oh * p, ow * p)
    else:
        xx = pred.reshape(B, oh, ow, p, p // 2, 1)
        xx = jnp.einsum('nhwpqc->nchpwq', xx)
        imgs = xx.reshape(B, 1, oh * p, ow * p // 2)
    return imgs


# ----------------------------------------------------------------------------
if __name__ == "__main__":
    key = jax.random.PRNGKey(0)
    x = jax.random.normal(key, (2, IN_CHANS, IMG_SIZE[0], IMG_SIZE[1]), jnp.float32)

    params = init_params(jax.random.PRNGKey(42))

    out = spr_forward(params, x, color='green')
    out = jax.block_until_ready(out)

    expected = (2, 1, IMG_SIZE[0] // 2, IMG_SIZE[1] // 2)
    assert out.shape == expected, (out.shape, expected)
    assert bool(jnp.all(jnp.isfinite(out)))
    print("KERNEL_OK")
</pallas_src>

<mosaic_0001>
module attributes {stable_mosaic.version = 11 : i64} {
  func.func @_linear_acc_kernel(%arg0: i32, %arg1: i32, %arg2: memref<32x128xbf16, #tpu.memory_space<vmem>>, %arg3: memref<128x64xbf16, #tpu.memory_space<vmem>>, %arg4: memref<1x64xf32, #tpu.memory_space<vmem>>, %arg5: memref<32x64xf32, #tpu.memory_space<vmem>>, %arg6: memref<32x64xf32, #tpu.memory_space<vmem>>) attributes {dimension_semantics = [#tpu.dimension_semantics<parallel>, #tpu.dimension_semantics<arbitrary>], iteration_bounds = array<i64: 1, 1>, scalar_prefetch = 0 : i64, scratch_operands = 1 : i64, tpu.core_type = #tpu.core_type<tc>, window_params = [{transform_indices = @transform_0, window_bounds = array<i64: 32, 128>}, {transform_indices = @transform_1, window_bounds = array<i64: 128, 64>}, {pipeline_mode = #tpu.pipeline_mode<synchronous>, transform_indices = @transform_2, window_bounds = array<i64: 1, 64>}, {transform_indices = @transform_3, window_bounds = array<i64: 32, 64>}]} {
    %c0_i32 = arith.constant 0 : i32
    %0 = arith.cmpi eq, %arg1, %c0_i32 : i32
    %1 = arith.extui %0 : i1 to i32
    %c0_i32_0 = arith.constant 0 : i32
    %2 = arith.cmpi ne, %1, %c0_i32_0 : i32
    scf.if %2 {
      %cst_10 = arith.constant 0.000000e+00 : f32
      %12 = vector.broadcast %cst_10 : f32 to vector<32x64xf32>
      %c0_11 = arith.constant 0 : index
      %c0_12 = arith.constant 0 : index
      %13 = vector.load %arg6[%c0_11, %c0_12] : memref<32x64xf32, #tpu.memory_space<vmem>>, vector<32x64xf32>
      tpu.vector_store %arg6[%c0_11, %c0_12], %12 {strides = array<i32>} : memref<32x64xf32, #tpu.memory_space<vmem>>, vector<32x64xf32>,
    } else {
    }
    %c0 = arith.constant 0 : index
    %c0_1 = arith.constant 0 : index
    %3 = vector.load %arg6[%c0, %c0_1] : memref<32x64xf32, #tpu.memory_space<vmem>>, vector<32x64xf32>
    %c0_2 = arith.constant 0 : index
    %c0_3 = arith.constant 0 : index
    %4 = vector.load %arg2[%c0_2, %c0_3] : memref<32x128xbf16, #tpu.memory_space<vmem>>, vector<32x128xbf16>
    %c0_4 = arith.constant 0 : index
    %c0_5 = arith.constant 0 : index
    %5 = vector.load %arg3[%c0_4, %c0_5] : memref<128x64xbf16, #tpu.memory_space<vmem>>, vector<128x64xbf16>
    %cst = arith.constant dense<0.000000e+00> : vector<32x64xf32>
    %6 = tpu.matmul %4, %5, %cst {dimension_numbers = #tpu.dot_dimension_numbers<[1], [0], [0], [1], [0, 0, 1, 1], [], []>} : vector<32x128xbf16>, vector<128x64xbf16>, vector<32x64xf32> -> vector<32x64xf32>
    %7 = arith.addf %3, %6 : vector<32x64xf32>
    %c0_6 = arith.constant 0 : index
    %c0_7 = arith.constant 0 : index
    %8 = vector.load %arg6[%c0_6, %c0_7] : memref<32x64xf32, #tpu.memory_space<vmem>>, vector<32x64xf32>
    tpu.vector_store %arg6[%c0_6, %c0_7], %7 {strides = array<i32>} : memref<32x64xf32, #tpu.memory_space<vmem>>, vector<32x64xf32>,
    %c0_i32_8 = arith.constant 0 : i32
    %9 = arith.cmpi eq, %arg1, %c0_i32_8 : i32
    %10 = arith.extui %9 : i1 to i32
    %c0_i32_9 = arith.constant 0 : i32
    %11 = arith.cmpi ne, %10, %c0_i32_9 : i32
    scf.if %11 {
      %c0_10 = arith.constant 0 : index
      %c0_11 = arith.constant 0 : index
      %12 = vector.load %arg6[%c0_10, %c0_11] : memref<32x64xf32, #tpu.memory_space<vmem>>, vector<32x64xf32>
      %c0_12 = arith.constant 0 : index
      %c0_13 = arith.constant 0 : index
      %13 = vector.load %arg4[%c0_12, %c0_13] : memref<1x64xf32, #tpu.memory_space<vmem>>, vector<1x64xf32>
      %14 = vector.broadcast %13 : vector<1x64xf32> to vector<32x64xf32>
      %15 = arith.addf %12, %14 : vector<32x64xf32>
      %c0_14 = arith.constant 0 : index
      %c0_15 = arith.constant 0 : index
      %16 = vector.load %arg5[%c0_14, %c0_15] : memref<32x64xf32, #tpu.memory_space<vmem>>, vector<32x64xf32>
      tpu.vector_store %arg5[%c0_14, %c0_15], %15 {strides = array<i32>} : memref<32x64xf32, #tpu.memory_space<vmem>>, vector<32x64xf32>,
    } else {
    }
    return
  }
  func.func @transform_0(%arg0: i32, %arg1: i32) -> (i32, i32) {
    %c0_i32 = arith.constant 0 : i32
    return %arg0, %arg1 : i32, i32
  }
  func.func @transform_1(%arg0: i32, %arg1: i32) -> (i32, i32) {
    %c0_i32 = arith.constant 0 : i32
    %c0_i32_0 = arith.constant 0 : i32
    return %arg1, %c0_i32 : i32, i32
  }
  func.func @transform_2(%arg0: i32, %arg1: i32) -> (i32, i32) {
    %c0_i32 = arith.constant 0 : i32
    %c0_i32_0 = arith.constant 0 : i32
    %c0_i32_1 = arith.constant 0 : i32
    return %c0_i32, %c0_i32_0 : i32, i32
  }
  func.func @transform_3(%arg0: i32, %arg1: i32) -> (i32, i32) {
    %c0_i32 = arith.constant 0 : i32
    %c0_i32_0 = arith.constant 0 : i32
    return %arg0, %c0_i32 : i32, i32
  }
}

</mosaic_0001>

<llo_original>
// kernel: tpu_custom_call.1
$region0: #{tpu_custom_call.1}
  #allocation0 [shape = 'u32[]', space=smem, size = 0x4, offset = 0x4, fixed_abs, tag = 'smem constant byte address 0x4 - core index']
  #allocation1 [shape = 'u32[72,128]{1,0:T(1,128)}', space=vmem, size = 0x9000, scoped, tag = 'internal scratch']
  #allocation2 [shape = 'f32[32,64]{1,0:T(8,128)}', space=vmem, size = 0x4000, scoped, tag = 'scratch operand']
  %s0 = inlined_call_operand.vmem [shape: bf16[32,128], index: 0, kind: input, shape index: {}]
  %s1 = inlined_call_operand.vmem [shape: bf16[128,64], index: 1, kind: input, shape index: {}]
  %s2 = inlined_call_operand.vmem [shape: f32[1,64], index: 2, kind: input, shape index: {}]
  %s3 = inlined_call_operand.hbm [shape: f32[32,64], index: 3, kind: output, shape index: {}]
  %s4 = sld [smem:[#allocation0]]
  $region30: #{tpu_custom_call.1} parent=0
    _
  %s6 = ssub.s32 1, %s4
  %s7 = scalar_select 0, %s6, %s4
  $region1: #{tpu_custom_call.1} parent=0
    #allocation3 [shape = 'u8[16384]{0}', space=vmem, size = 0x4000, scoped, tag = 'output window, operand 0, single buffered']
    #allocation4 [shape = 's32[1]{0}', space=sflag, size = 0x4, scoped, tag = 'scoped memory for tpu_custom_call.1']
    %8 = vsyncpa [#allocation4], 0
    // Predicated region
    $region2: #{tpu_custom_call.1} parent=1 // pred_check
      _
    $region3: #{tpu_custom_call.1} parent=1 // pred_check_branch
      %10 = sbr.rel (0) target = $region5
    $region4: #{tpu_custom_call.1} parent=1 // pred_region
      _
    $region5: #{tpu_custom_call.1} parent=1 // pred_fallthru
      _
    // Predicated region
    $region6: #{tpu_custom_call.1} parent=1 // pred_check
      _
    $region7: #{tpu_custom_call.1} parent=1 // pred_check_branch
      %12 = sbr.rel (0) target = $region9
    $region8: #{tpu_custom_call.1} parent=1 // pred_region
      _
    $region9: #{tpu_custom_call.1} parent=1 // pred_fallthru
      _
    // Predicated region
    $region10: #{tpu_custom_call.1} parent=1 // pred_check
      _
    $region11: #{tpu_custom_call.1} parent=1 // pred_check_branch
      %14 = sbr.rel (0) target = $region13
    $region12: #{tpu_custom_call.1} parent=1 // pred_region
      _
    $region13: #{tpu_custom_call.1} parent=1 // pred_fallthru
      _
    %p15 = scmp.eq.s32.totalorder 0, 0
    // Predicated region
    $region14: #{tpu_custom_call.1} parent=1 // pred_check
      %p16 = pneg %p15
    $region15: #{tpu_custom_call.1} parent=1 // pred_check_branch
      %18 = sbr.rel (%p16) target = $region17
    $region16: #{tpu_custom_call.1} parent=1 // pred_region
      %vm19 = vcmask 523264
      %20 = vst.msk [vmem:[#allocation2] sm:$0xff] %vm19, 0.0
      %21 = vst.msk [vmem:[#allocation2 + $0x8] sm:$0xff] %vm19, 0.0
      %22 = vst.msk [vmem:[#allocation2 + $0x10] sm:$0xff] %vm19, 0.0
      %23 = vst.msk [vmem:[#allocation2 + $0x18] sm:$0xff] %vm19, 0.0
    $region17: #{tpu_custom_call.1} parent=1 // pred_fallthru
      _
    %v24 = vld [vmem:[#allocation2] sm:$0xff]
    %v25 = vld [vmem:[#allocation2 + $0x8] sm:$0xff]
    %v26 = vld [vmem:[#allocation2 + $0x10] sm:$0xff]
    %v27 = vld [vmem:[#allocation2 + $0x18] sm:$0xff]
    %v28 = vld [vmem:[%s0] sm:$0xf]
    %v29 = vld [vmem:[%s0 + $0x4] sm:$0xf]
    %v30 = vld [vmem:[%s0 + $0x8] sm:$0xf]
    %v31 = vld [vmem:[%s0 + $0xc] sm:$0xf]
    %v32 = vld [vmem:[%s1] sm:$0xf]
    %v33 = vld [vmem:[%s1 + $0x4] sm:$0xf]
    %v34 = vld [vmem:[%s1 + $0x8] sm:$0xf]
    %v35 = vld [vmem:[%s1 + $0xc] sm:$0xf]
    %v36 = vld [vmem:[%s1 + $0x10] sm:$0xf]
    %v37 = vld [vmem:[%s1 + $0x14] sm:$0xf]
    %v38 = vld [vmem:[%s1 + $0x18] sm:$0xf]
    %v39 = vld [vmem:[%s1 + $0x1c] sm:$0xf]
    %v40 = vld [vmem:[%s1 + $0x20] sm:$0xf]
    %v41 = vld [vmem:[%s1 + $0x24] sm:$0xf]
    %v42 = vld [vmem:[%s1 + $0x28] sm:$0xf]
    %v43 = vld [vmem:[%s1 + $0x2c] sm:$0xf]
    %v44 = vld [vmem:[%s1 + $0x30] sm:$0xf]
    %v45 = vld [vmem:[%s1 + $0x34] sm:$0xf]
    %v46 = vld [vmem:[%s1 + $0x38] sm:$0xf]
    %v47 = vld [vmem:[%s1 + $0x3c] sm:$0xf]
    %v52 = vunpack.c.l.b16 %v28
    %v53 = vunpack.c.l.b16 %v29
    %v54 = vunpack.c.l.b16 %v30
    %v55 = vunpack.c.l.b16 %v31
    %v56 = vpack.c.b16 %v53, %v52
    %v57 = vpack.c.b16 %v55, %v54
    %v76 = vunpack.c.l.b16 %v32
    %v77 = vunpack.c.l.b16 %v33
    %v78 = vunpack.c.l.b16 %v34
    %v79 = vunpack.c.l.b16 %v35
    %v80 = vunpack.c.l.b16 %v36
    %v81 = vunpack.c.l.b16 %v37
    %v82 = vunpack.c.l.b16 %v38
    %v83 = vunpack.c.l.b16 %v39
    %v84 = vunpack.c.l.b16 %v40
    %v85 = vunpack.c.l.b16 %v41
    %v86 = vunpack.c.l.b16 %v42
    %v87 = vunpack.c.l.b16 %v43
    %v88 = vunpack.c.l.b16 %v44
    %v89 = vunpack.c.l.b16 %v45
    %v90 = vunpack.c.l.b16 %v46
    %v91 = vunpack.c.l.b16 %v47
    %v92 = vpack.c.b16 %v77, %v76
    %v93 = vpack.c.b16 %v79, %v78
    %v94 = vpack.c.b16 %v81, %v80
    %v95 = vpack.c.b16 %v83, %v82
    %v96 = vpack.c.b16 %v85, %v84
    %v97 = vpack.c.b16 %v87, %v86
    %v98 = vpack.c.b16 %v89, %v88
    %v99 = vpack.c.b16 %v91, %v90
    %108 = vmatpush.bf16.msra.mxu0 %v99
    %109 = vmatpush.bf16.msra.mxu0 %v98
    %110 = vmatpush.bf16.msra.mxu0 %v97
    %111 = vmatpush.bf16.msra.mxu0 %v96
    %112 = vmatpush.bf16.msra.mxu0 %v95
    %113 = vmatpush.bf16.msra.mxu0 %v94
    %114 = vmatpush.bf16.msra.mxu0 %v93
    %115 = vmatpush.bf16.msra.mxu0 %v92
    %116 = vmatmul.bf16.gmra.mxu0 %v56
    %v117 = vpop.f32.mrf.mxu0
    %v118 = vadd.f32 0.0, %v117
    %v119 = vpop.f32.mrf.mxu0
    %v120 = vadd.f32 0.0, %v119
    %121 = vmatmul.bf16.gmra.mxu0 %v57
    %v122 = vpop.f32.mrf.mxu0
    %v123 = vadd.f32 0.0, %v122
    %v124 = vpop.f32.mrf.mxu0
    %v125 = vadd.f32 0.0, %v124
    %126 = vdwg.mxu0
    %v127 = vadd.f32 %v24, %v118
    %v128 = vadd.f32 %v25, %v120
    %v129 = vadd.f32 %v26, %v123
    %v130 = vadd.f32 %v27, %v125
    %vm131 = vcmask 523264
    %132 = vst.msk [vmem:[#allocation2] sm:$0xff] %vm131, %v127
    %133 = vst.msk [vmem:[#allocation2 + $0x8] sm:$0xff] %vm131, %v128
    %134 = vst.msk [vmem:[#allocation2 + $0x10] sm:$0xff] %vm131, %v129
    %135 = vst.msk [vmem:[#allocation2 + $0x18] sm:$0xff] %vm131, %v130
    // Predicated region
    $region18: #{tpu_custom_call.1} parent=1 // pred_check
      %p136 = pneg %p15
    $region19: #{tpu_custom_call.1} parent=1 // pred_check_branch
      %138 = sbr.rel (%p136) target = $region21
    $region20: #{tpu_custom_call.1} parent=1 // pred_region
      %v139 = vld [vmem:[#allocation2] sm:$0xff]
      %v140 = vld [vmem:[#allocation2 + $0x8] sm:$0xff]
      %v141 = vld [vmem:[#allocation2 + $0x10] sm:$0xff]
      %v142 = vld [vmem:[#allocation2 + $0x18] sm:$0xff]
      %v143 = vld [vmem:[%s2] sm:$0x1]
      %v145 = vperm.slane %v143, 0
      %v147 = vadd.f32 %v139, %v145
      %v148 = vadd.f32 %v140, %v145
      %v149 = vadd.f32 %v141, %v145
      %v150 = vadd.f32 %v142, %v145
      %151 = vst.msk [vmem:[#allocation3] sm:$0xff] %vm131, %v147
      %152 = vst.msk [vmem:[#allocation3 + $0x8] sm:$0xff] %vm131, %v148
      %153 = vst.msk [vmem:[#allocation3 + $0x10] sm:$0xff] %vm131, %v149
      %154 = vst.msk [vmem:[#allocation3 + $0x18] sm:$0xff] %vm131, %v150
    $region21: #{tpu_custom_call.1} parent=1 // pred_fallthru
      _
    // Predicated region
    $region22: #{tpu_custom_call.1} parent=1 // pred_check
      _
    $region23: #{tpu_custom_call.1} parent=1 // pred_check_branch
      %156 = sbr.rel (0) target = $region25
    $region24: #{tpu_custom_call.1} parent=1 // pred_region
      %158 = vsyncadd [#allocation4], 0
      %s159 = sshll.u32 [#allocation3], 4
      %s160 = int_to_ptr.vmem [resolvable:$true] %s159
      %s161 = sshll.u32 %s3, 4
      %s162 = int_to_ptr.hbm [resolvable:$true] %s161
      %167 = dma.vmem_to_hbm [thread:$0]  %s160, 512, %s162, [#allocation4], 128, 128, 8
    $region25: #{tpu_custom_call.1} parent=1 // pred_fallthru
      _
    // Predicated region
    $region26: #{tpu_custom_call.1} parent=1 // pred_check
      _
    $region27: #{tpu_custom_call.1} parent=1 // pred_check_branch
      %169 = sbr.rel (0) target = $region29
    $region28: #{tpu_custom_call.1} parent=1 // pred_region
      %171 = dma.done [#allocation4], 512
    $region29: #{tpu_custom_call.1} parent=1 // pred_fallthru
      _
    %172 = vsyncpa [#allocation4], 1

</llo_original>
